<compile_context>
chip_gen: v7x
topology: tpu7x:2x2x1
jax: 0.10.0
libtpu: 0.0.40
codegen_flags: <defaults>
</compile_context>

<pallas_src>
import jax
import jax.numpy as jnp
from jax.experimental import pallas as pl
from jax.experimental.pallas import tpu as pltpu


# ----------------------------------------------------------------------------
# Pallas kernels
# ----------------------------------------------------------------------------

def _channel_matmul_kernel(w_ref, x_ref, b_ref, o_ref):
    # w_ref: (Cout, K)  x_ref: (1, K, t)  b_ref: (Cout, 1)  o_ref: (1, Cout, t)
    acc = jnp.dot(w_ref[...], x_ref[0], preferred_element_type=jnp.float32)
    o_ref[0] = (acc + b_ref[...]).astype(o_ref.dtype)


def _bn_relu_kernel(x_ref, scale_ref, shift_ref, o_ref):
    # x_ref: (1, C, t)  scale/shift: (C, 1)  o_ref: (1, C, t)
    y = x_ref[0] * scale_ref[...] + shift_ref[...]
    o_ref[0] = jnp.maximum(y, 0.0).astype(o_ref.dtype)


def _hw_tiling(hw, k_rows, itemsize, *, max_tile=4096, vmem_budget=8 * 1024 * 1024):
    """Pick a lane tile (multiple of 128) sized against a per-buffer VMEM budget."""
    # double-buffered activation block = 2 * K * t * itemsize  <=  vmem_budget
    t_fit = max(128, (vmem_budget // (2 * max(k_rows, 1) * itemsize)) // 128 * 128)
    t = min(max_tile, t_fit, ((hw + 127) // 128) * 128)
    hw_p = pl.cdiv(hw, t) * t          # remainder handled by zero padding, not assert
    return t, hw_p


def channel_matmul(w, x, b):
    """out[n] = w @ x[n] + b[:, None]  (NCHW-friendly: lanes = flattened spatial).

    w: (Cout, K), x: (N, K, HW), b: (Cout,)  ->  (N, Cout, HW)
    """
    n, k, hw = x.shape
    cout = w.shape[0]
    t, hw_p = _hw_tiling(hw, k, x.dtype.itemsize)
    if hw_p != hw:
        x = jnp.pad(x, ((0, 0), (0, 0), (0, hw_p - hw)))
    b2 = b.reshape(cout, 1).astype(x.dtype)

    cost = pl.CostEstimate(
        flops=2 * n * cout * k * hw_p,
        transcendentals=0,
        bytes_accessed=(n * k * hw_p + n * cout * hw_p + cout * k + cout)
        * x.dtype.itemsize,
    )

    out = pl.pallas_call(
        _channel_matmul_kernel,
        out_shape=jax.ShapeDtypeStruct((n, cout, hw_p), x.dtype),
        grid_spec=pltpu.PrefetchScalarGridSpec(
            num_scalar_prefetch=0,
            grid=(n, hw_p // t),
            in_specs=[
                pl.BlockSpec((cout, k), lambda i, j: (0, 0)),     # weights: resident
                pl.BlockSpec((1, k, t), lambda i, j: (i, 0, j)),  # activations
                pl.BlockSpec((cout, 1), lambda i, j: (0, 0)),     # bias: resident
            ],
            out_specs=pl.BlockSpec((1, cout, t), lambda i, j: (i, 0, j)),
        ),
        compiler_params=pltpu.CompilerParams(
            dimension_semantics=("parallel", "parallel"),
            vmem_limit_bytes=32 * 1024 * 1024,
        ),
        cost_estimate=cost,
    )(w.astype(x.dtype), x, b2)
    return out if hw_p == hw else out[:, :, :hw]


def bn_relu(x, scale, shift):
    """relu(x * scale[c] + shift[c]) with x: (N, C, HW), lane-dense over HW."""
    n, c, hw = x.shape
    t, hw_p = _hw_tiling(hw, c, x.dtype.itemsize)
    if hw_p != hw:
        x = jnp.pad(x, ((0, 0), (0, 0), (0, hw_p - hw)))
    out = pl.pallas_call(
        _bn_relu_kernel,
        out_shape=jax.ShapeDtypeStruct((n, c, hw_p), x.dtype),
        grid_spec=pltpu.PrefetchScalarGridSpec(
            num_scalar_prefetch=0,
            grid=(n, hw_p // t),
            in_specs=[
                pl.BlockSpec((1, c, t), lambda i, j: (i, 0, j)),
                pl.BlockSpec((c, 1), lambda i, j: (0, 0)),
                pl.BlockSpec((c, 1), lambda i, j: (0, 0)),
            ],
            out_specs=pl.BlockSpec((1, c, t), lambda i, j: (i, 0, j)),
        ),
        compiler_params=pltpu.CompilerParams(
            dimension_semantics=("parallel", "parallel"),
            vmem_limit_bytes=32 * 1024 * 1024,
        ),
    )(x, scale.reshape(c, 1).astype(x.dtype), shift.reshape(c, 1).astype(x.dtype))
    return out if hw_p == hw else out[:, :, :hw]


# ----------------------------------------------------------------------------
# Module ops built on the kernels
# ----------------------------------------------------------------------------

def conv_transpose_2x2_s2(x, w, b):
    """nn.ConvTranspose2d(Cin, Cout, kernel_size=2, stride=2).

    stride == kernel => non-overlapping: it is a (4*Cout, Cin) channel matmul in
    NCHW (lanes = H*W) followed by a depth-to-space interleave.
    x: (N, Cin, H, W), w: (Cin, Cout, 2, 2), b: (Cout,) -> (N, Cout, 2H, 2W)
    """
    n, cin, h, wd = x.shape
    cout = w.shape[1]
    w4 = jnp.transpose(w, (2, 3, 1, 0)).reshape(4 * cout, cin)  # [(dy,dx,co), ci]
    b4 = jnp.tile(b, 4)
    y = channel_matmul(w4, x.reshape(n, cin, h * wd), b4)       # (N, 4*Cout, H*W)
    y = y.reshape(n, 2, 2, cout, h, wd)                         # (N, dy, dx, co, h, w)
    y = jnp.transpose(y, (0, 3, 4, 1, 5, 2)).reshape(n, cout, 2 * h, 2 * wd)
    return y


def conv3x3_same(x, w, b):
    """nn.Conv2d(C, Cout, kernel_size=3, padding=1) via 9-tap im2col + lane-dense matmul.

    x: (N, C, H, W), w: (Cout, C, 3, 3), b: (Cout,) -> (N, Cout, H, W)
    """
    n, c, h, wd = x.shape
    cout = w.shape[0]
    xp = jnp.pad(x, ((0, 0), (0, 0), (1, 1), (1, 1)))
    taps = [xp[:, :, dy:dy + h, dx:dx + wd] for dy in range(3) for dx in range(3)]
    xcol = jnp.concatenate(taps, axis=1).reshape(n, 9 * c, h * wd)
    wmat = jnp.transpose(w, (0, 2, 3, 1)).reshape(cout, 9 * c)
    y = channel_matmul(wmat, xcol, b)                           # (N, Cout, H*W)
    return y.reshape(n, cout, h, wd)


def batchnorm_relu(x, gamma, beta, *, eps=1e-5):
    """Training-mode BatchNorm2d (batch statistics) + ReLU; affine+ReLU fused in Pallas."""
    n, c, h, wd = x.shape
    xf = x.reshape(n, c, h * wd)
    # TODO(synk): per-channel mean/var reduction over (N, H, W) is left to XLA;
    # it is tiny vs. the convs and could be emitted as extra kernel outputs later.
    mean = jnp.mean(xf, axis=(0, 2))
    var = jnp.mean(jnp.square(xf - mean[None, :, None]), axis=(0, 2))
    scale = gamma / jnp.sqrt(var + eps)
    shift = beta - mean * scale
    return bn_relu(xf, scale, shift).reshape(n, c, h, wd)


def up_forward(params, x1, x2):
    """Pallas implementation of Up.forward(x1, x2)."""
    y1 = conv_transpose_2x2_s2(x1, params["up_w"], params["up_b"])
    diff_y = x2.shape[2] - y1.shape[2]
    diff_x = x2.shape[3] - y1.shape[3]
    y1 = jnp.pad(y1, ((0, 0), (0, 0),
                      (diff_y // 2, diff_y - diff_y // 2),
                      (diff_x // 2, diff_x - diff_x // 2)))
    x = jnp.concatenate([x2, y1], axis=1)
    h = conv3x3_same(x, params["c1_w"], params["c1_b"])
    h = batchnorm_relu(h, params["bn1_g"], params["bn1_b"])
    h = conv3x3_same(h, params["c2_w"], params["c2_b"])
    h = batchnorm_relu(h, params["bn2_g"], params["bn2_b"])
    return h


# ----------------------------------------------------------------------------
# Pure-JAX reference (for a sanity check)
# ----------------------------------------------------------------------------

def ref_up_forward(params, x1, x2):
    n, _, h, wd = x1.shape
    chalf = params["up_w"].shape[1]
    y4 = jnp.einsum("nchw,cokl->nohwkl", x1, params["up_w"])
    y1 = jnp.transpose(y4, (0, 1, 2, 4, 3, 5)).reshape(n, chalf, 2 * h, 2 * wd)
    y1 = y1 + params["up_b"][None, :, None, None]
    diff_y = x2.shape[2] - y1.shape[2]
    diff_x = x2.shape[3] - y1.shape[3]
    y1 = jnp.pad(y1, ((0, 0), (0, 0),
                      (diff_y // 2, diff_y - diff_y // 2),
                      (diff_x // 2, diff_x - diff_x // 2)))
    x = jnp.concatenate([x2, y1], axis=1)

    def conv_bn_relu(hh, w, b, g, bt):
        hh = jax.lax.conv_general_dilated(
            hh, w, (1, 1), "SAME",
            dimension_numbers=("NCHW", "OIHW", "NCHW")) + b[None, :, None, None]
        m = jnp.mean(hh, axis=(0, 2, 3), keepdims=True)
        v = jnp.mean(jnp.square(hh - m), axis=(0, 2, 3), keepdims=True)
        hh = (hh - m) / jnp.sqrt(v + 1e-5) * g[None, :, None, None] + bt[None, :, None, None]
        return jnp.maximum(hh, 0.0)

    hh = conv_bn_relu(x, params["c1_w"], params["c1_b"], params["bn1_g"], params["bn1_b"])
    hh = conv_bn_relu(hh, params["c2_w"], params["c2_b"], params["bn2_g"], params["bn2_b"])
    return hh


if __name__ == "__main__":
    key = jax.random.PRNGKey(0)
    ks = jax.random.split(key, 12)

    N, IN_CH, OUT_CH, H, W = 2, 4, 4, 8, 8      # x1: (2,4,8,8); x2: (2,2,16,16)
    HALF = IN_CH // 2

    x1 = jax.random.normal(ks[0], (N, IN_CH, H, W), jnp.float32)
    x2 = jax.random.normal(ks[1], (N, HALF, 2 * H, 2 * W), jnp.float32)

    def uni(k, shape, fan_in):
        bound = 1.0 / (fan_in ** 0.5)
        return jax.random.uniform(k, shape, jnp.float32, -bound, bound)

    params = {
        # ConvTranspose2d(IN_CH, IN_CH // 2, kernel_size=2, stride=2)
        "up_w": uni(ks[2], (IN_CH, HALF, 2, 2), HALF * 4),
        "up_b": uni(ks[3], (HALF,), HALF * 4),
        # DoubleConv(IN_CH, OUT_CH): Conv3x3 -> BN -> ReLU -> Conv3x3 -> BN -> ReLU
        "c1_w": uni(ks[4], (OUT_CH, IN_CH, 3, 3), IN_CH * 9),
        "c1_b": uni(ks[5], (OUT_CH,), IN_CH * 9),
        "bn1_g": jax.random.uniform(ks[6], (OUT_CH,), jnp.float32, 0.5, 1.5),
        "bn1_b": jax.random.uniform(ks[7], (OUT_CH,), jnp.float32, -0.5, 0.5),
        "c2_w": uni(ks[8], (OUT_CH, OUT_CH, 3, 3), OUT_CH * 9),
        "c2_b": uni(ks[9], (OUT_CH,), OUT_CH * 9),
        "bn2_g": jax.random.uniform(ks[10], (OUT_CH,), jnp.float32, 0.5, 1.5),
        "bn2_b": jax.random.uniform(ks[11], (OUT_CH,), jnp.float32, -0.5, 0.5),
    }

    y = jax.jit(up_forward)(params, x1, x2)
    y = jax.block_until_ready(y)

    ref = ref_up_forward(params, x1, x2)
    assert y.shape == (N, OUT_CH, 2 * H, 2 * W), y.shape
    assert jnp.allclose(y, ref, atol=1e-3, rtol=1e-3), float(jnp.max(jnp.abs(y - ref)))

    print("KERNEL_OK")
</pallas_src>

<mosaic_0001>
module attributes {stable_mosaic.version = 11 : i64} {
  func.func @_channel_matmul_kernel(%arg0: i32, %arg1: i32, %arg2: memref<8x4xf32, #tpu.memory_space<vmem>>, %arg3: memref<1x4x128xf32, #tpu.memory_space<vmem>>, %arg4: memref<8x1xf32, #tpu.memory_space<vmem>>, %arg5: memref<1x8x128xf32, #tpu.memory_space<vmem>>) attributes {dimension_semantics = [#tpu.dimension_semantics<parallel>, #tpu.dimension_semantics<parallel>], iteration_bounds = array<i64: 2, 1>, scalar_prefetch = 0 : i64, scratch_operands = 0 : i64, tpu.core_type = #tpu.core_type<tc>, window_params = [{pipeline_mode = #tpu.pipeline_mode<synchronous>, transform_indices = @transform_0, window_bounds = array<i64: 8, 4>}, {transform_indices = @transform_1, window_bounds = array<i64: 1, 4, 128>}, {pipeline_mode = #tpu.pipeline_mode<synchronous>, transform_indices = @transform_2, window_bounds = array<i64: 8, 1>}, {transform_indices = @transform_3, window_bounds = array<i64: 1, 8, 128>}]} {
    %c0 = arith.constant 0 : index
    %c0_0 = arith.constant 0 : index
    %0 = vector.load %arg2[%c0, %c0_0] : memref<8x4xf32, #tpu.memory_space<vmem>>, vector<8x4xf32>
    %c0_1 = arith.constant 0 : index
    %c0_2 = arith.constant 0 : index
    %c0_3 = arith.constant 0 : index
    %1 = vector.load %arg3[%c0_1, %c0_2, %c0_3] : memref<1x4x128xf32, #tpu.memory_space<vmem>>, vector<1x4x128xf32>
    %2 = vector.shape_cast %1 : vector<1x4x128xf32> to vector<4x128xf32>
    %cst = arith.constant dense<0.000000e+00> : vector<8x128xf32>
    %3 = tpu.matmul %0, %2, %cst {dimension_numbers = #tpu.dot_dimension_numbers<[1], [0], [0], [1], [0, 0, 1, 1], [], []>} : vector<8x4xf32>, vector<4x128xf32>, vector<8x128xf32> -> vector<8x128xf32>
    %c0_4 = arith.constant 0 : index
    %c0_5 = arith.constant 0 : index
    %4 = vector.load %arg4[%c0_4, %c0_5] : memref<8x1xf32, #tpu.memory_space<vmem>>, vector<8x1xf32>
    %5 = vector.broadcast %4 : vector<8x1xf32> to vector<8x128xf32>
    %6 = arith.addf %3, %5 : vector<8x128xf32>
    %c0_6 = arith.constant 0 : index
    %c0_7 = arith.constant 0 : index
    %c0_8 = arith.constant 0 : index
    %7 = vector.load %arg5[%c0_6, %c0_7, %c0_8] : memref<1x8x128xf32, #tpu.memory_space<vmem>>, vector<1x8x128xf32>
    %8 = vector.shape_cast %7 : vector<1x8x128xf32> to vector<8x128xf32>
    %9 = vector.shape_cast %6 : vector<8x128xf32> to vector<1x8x128xf32>
    tpu.vector_store %arg5[%c0_6, %c0_7, %c0_8], %9 {strides = array<i32>} : memref<1x8x128xf32, #tpu.memory_space<vmem>>, vector<1x8x128xf32>,
    return
  }
  func.func @transform_0(%arg0: i32, %arg1: i32) -> (i32, i32) {
    %c0_i32 = arith.constant 0 : i32
    %c0_i32_0 = arith.constant 0 : i32
    %c0_i32_1 = arith.constant 0 : i32
    return %c0_i32, %c0_i32_0 : i32, i32
  }
  func.func @transform_1(%arg0: i32, %arg1: i32) -> (i32, i32, i32) {
    %c0_i32 = arith.constant 0 : i32
    %c0_i32_0 = arith.constant 0 : i32
    return %arg0, %c0_i32, %arg1 : i32, i32, i32
  }
  func.func @transform_2(%arg0: i32, %arg1: i32) -> (i32, i32) {
    %c0_i32 = arith.constant 0 : i32
    %c0_i32_0 = arith.constant 0 : i32
    %c0_i32_1 = arith.constant 0 : i32
    return %c0_i32, %c0_i32_0 : i32, i32
  }
  func.func @transform_3(%arg0: i32, %arg1: i32) -> (i32, i32, i32) {
    %c0_i32 = arith.constant 0 : i32
    %c0_i32_0 = arith.constant 0 : i32
    return %arg0, %c0_i32, %arg1 : i32, i32, i32
  }
}

module attributes {stable_mosaic.version = 11 : i64} {
  func.func @_channel_matmul_kernel(%arg0: i32, %arg1: i32, %arg2: memref<4x36xf32, #tpu.memory_space<vmem>>, %arg3: memref<1x36x256xf32, #tpu.memory_space<vmem>>, %arg4: memref<4x1xf32, #tpu.memory_space<vmem>>, %arg5: memref<1x4x256xf32, #tpu.memory_space<vmem>>) attributes {dimension_semantics = [#tpu.dimension_semantics<parallel>, #tpu.dimension_semantics<parallel>], iteration_bounds = array<i64: 2, 1>, scalar_prefetch = 0 : i64, scratch_operands = 0 : i64, tpu.core_type = #tpu.core_type<tc>, window_params = [{pipeline_mode = #tpu.pipeline_mode<synchronous>, transform_indices = @transform_0, window_bounds = array<i64: 4, 36>}, {transform_indices = @transform_1, window_bounds = array<i64: 1, 36, 256>}, {pipeline_mode = #tpu.pipeline_mode<synchronous>, transform_indices = @transform_2, window_bounds = array<i64: 4, 1>}, {transform_indices = @transform_3, window_bounds = array<i64: 1, 4, 256>}]} {
    %c0 = arith.constant 0 : index
    %c0_0 = arith.constant 0 : index
    %0 = vector.load %arg2[%c0, %c0_0] : memref<4x36xf32, #tpu.memory_space<vmem>>, vector<4x36xf32>
    %c0_1 = arith.constant 0 : index
    %c0_2 = arith.constant 0 : index
    %c0_3 = arith.constant 0 : index
    %1 = vector.load %arg3[%c0_1, %c0_2, %c0_3] : memref<1x36x256xf32, #tpu.memory_space<vmem>>, vector<1x36x256xf32>
    %2 = vector.shape_cast %1 : vector<1x36x256xf32> to vector<36x256xf32>
    %cst = arith.constant dense<0.000000e+00> : vector<4x256xf32>
    %3 = tpu.matmul %0, %2, %cst {dimension_numbers = #tpu.dot_dimension_numbers<[1], [0], [0], [1], [0, 0, 1, 1], [], []>} : vector<4x36xf32>, vector<36x256xf32>, vector<4x256xf32> -> vector<4x256xf32>
    %c0_4 = arith.constant 0 : index
    %c0_5 = arith.constant 0 : index
    %4 = vector.load %arg4[%c0_4, %c0_5] : memref<4x1xf32, #tpu.memory_space<vmem>>, vector<4x1xf32>
    %5 = vector.broadcast %4 : vector<4x1xf32> to vector<4x256xf32>
    %6 = arith.addf %3, %5 : vector<4x256xf32>
    %c0_6 = arith.constant 0 : index
    %c0_7 = arith.constant 0 : index
    %c0_8 = arith.constant 0 : index
    %7 = vector.load %arg5[%c0_6, %c0_7, %c0_8] : memref<1x4x256xf32, #tpu.memory_space<vmem>>, vector<1x4x256xf32>
    %8 = vector.shape_cast %7 : vector<1x4x256xf32> to vector<4x256xf32>
    %9 = vector.shape_cast %6 : vector<4x256xf32> to vector<1x4x256xf32>
    tpu.vector_store %arg5[%c0_6, %c0_7, %c0_8], %9 {strides = array<i32>} : memref<1x4x256xf32, #tpu.memory_space<vmem>>, vector<1x4x256xf32>,
    return
  }
  func.func @transform_0(%arg0: i32, %arg1: i32) -> (i32, i32) {
    %c0_i32 = arith.constant 0 : i32
    %c0_i32_0 = arith.constant 0 : i32
    %c0_i32_1 = arith.constant 0 : i32
    return %c0_i32, %c0_i32_0 : i32, i32
  }
  func.func @transform_1(%arg0: i32, %arg1: i32) -> (i32, i32, i32) {
    %c0_i32 = arith.constant 0 : i32
    %c0_i32_0 = arith.constant 0 : i32
    return %arg0, %c0_i32, %arg1 : i32, i32, i32
  }
  func.func @transform_2(%arg0: i32, %arg1: i32) -> (i32, i32) {
    %c0_i32 = arith.constant 0 : i32
    %c0_i32_0 = arith.constant 0 : i32
    %c0_i32_1 = arith.constant 0 : i32
    return %c0_i32, %c0_i32_0 : i32, i32
  }
  func.func @transform_3(%arg0: i32, %arg1: i32) -> (i32, i32, i32) {
    %c0_i32 = arith.constant 0 : i32
    %c0_i32_0 = arith.constant 0 : i32
    return %arg0, %c0_i32, %arg1 : i32, i32, i32
  }
}

module attributes {stable_mosaic.version = 11 : i64} {
  func.func @_bn_relu_kernel(%arg0: i32, %arg1: i32, %arg2: memref<1x4x256xf32, #tpu.memory_space<vmem>>, %arg3: memref<4x1xf32, #tpu.memory_space<vmem>>, %arg4: memref<4x1xf32, #tpu.memory_space<vmem>>, %arg5: memref<1x4x256xf32, #tpu.memory_space<vmem>>) attributes {dimension_semantics = [#tpu.dimension_semantics<parallel>, #tpu.dimension_semantics<parallel>], iteration_bounds = array<i64: 2, 1>, scalar_prefetch = 0 : i64, scratch_operands = 0 : i64, tpu.core_type = #tpu.core_type<tc>, window_params = [{transform_indices = @transform_0, window_bounds = array<i64: 1, 4, 256>}, {pipeline_mode = #tpu.pipeline_mode<synchronous>, transform_indices = @transform_1, window_bounds = array<i64: 4, 1>}, {pipeline_mode = #tpu.pipeline_mode<synchronous>, transform_indices = @transform_2, window_bounds = array<i64: 4, 1>}, {transform_indices = @transform_3, window_bounds = array<i64: 1, 4, 256>}]} {
    %c0 = arith.constant 0 : index
    %c0_0 = arith.constant 0 : index
    %c0_1 = arith.constant 0 : index
    %0 = vector.load %arg2[%c0, %c0_0, %c0_1] : memref<1x4x256xf32, #tpu.memory_space<vmem>>, vector<1x4x256xf32>
    %1 = vector.shape_cast %0 : vector<1x4x256xf32> to vector<4x256xf32>
    %c0_2 = arith.constant 0 : index
    %c0_3 = arith.constant 0 : index
    %2 = vector.load %arg3[%c0_2, %c0_3] : memref<4x1xf32, #tpu.memory_space<vmem>>, vector<4x1xf32>
    %3 = vector.broadcast %2 : vector<4x1xf32> to vector<4x256xf32>
    %4 = arith.mulf %1, %3 : vector<4x256xf32>
    %c0_4 = arith.constant 0 : index
    %c0_5 = arith.constant 0 : index
    %5 = vector.load %arg4[%c0_4, %c0_5] : memref<4x1xf32, #tpu.memory_space<vmem>>, vector<4x1xf32>
    %6 = vector.broadcast %5 : vector<4x1xf32> to vector<4x256xf32>
    %7 = arith.addf %4, %6 : vector<4x256xf32>
    %cst = arith.constant 0.000000e+00 : f32
    %8 = vector.broadcast %cst : f32 to vector<4x256xf32>
    %9 = arith.maximumf %7, %8 : vector<4x256xf32>
    %c0_6 = arith.constant 0 : index
    %c0_7 = arith.constant 0 : index
    %c0_8 = arith.constant 0 : index
    %10 = vector.load %arg5[%c0_6, %c0_7, %c0_8] : memref<1x4x256xf32, #tpu.memory_space<vmem>>, vector<1x4x256xf32>
    %11 = vector.shape_cast %10 : vector<1x4x256xf32> to vector<4x256xf32>
    %12 = vector.shape_cast %9 : vector<4x256xf32> to vector<1x4x256xf32>
    tpu.vector_store %arg5[%c0_6, %c0_7, %c0_8], %12 {strides = array<i32>} : memref<1x4x256xf32, #tpu.memory_space<vmem>>, vector<1x4x256xf32>,
    return
  }
  func.func @transform_0(%arg0: i32, %arg1: i32) -> (i32, i32, i32) {
    %c0_i32 = arith.constant 0 : i32
    %c0_i32_0 = arith.constant 0 : i32
    return %arg0, %c0_i32, %arg1 : i32, i32, i32
  }
  func.func @transform_1(%arg0: i32, %arg1: i32) -> (i32, i32) {
    %c0_i32 = arith.constant 0 : i32
    %c0_i32_0 = arith.constant 0 : i32
    %c0_i32_1 = arith.constant 0 : i32
    return %c0_i32, %c0_i32_0 : i32, i32
  }
  func.func @transform_2(%arg0: i32, %arg1: i32) -> (i32, i32) {
    %c0_i32 = arith.constant 0 : i32
    %c0_i32_0 = arith.constant 0 : i32
    %c0_i32_1 = arith.constant 0 : i32
    return %c0_i32, %c0_i32_0 : i32, i32
  }
  func.func @transform_3(%arg0: i32, %arg1: i32) -> (i32, i32, i32) {
    %c0_i32 = arith.constant 0 : i32
    %c0_i32_0 = arith.constant 0 : i32
    return %arg0, %c0_i32, %arg1 : i32, i32, i32
  }
}

</mosaic_0001>

<llo_original>
// kernel: tile.0
$region0: #{tile.0}
  %s0 = inlined_call_operand.vmem [shape: f32[4,2], index: 0, kind: input, shape index: {}]
  %s1 = inlined_call_operand.vmem [shape: f32[8,1], index: 1, kind: output, shape index: {}]
  $region1: #{tile.0} parent=0
    #allocation0 [shape = 'u8[4096]{0}', space=vmem, size = 0x1000, scoped, tag = 'scoped mem for input reshape']
    %s3 = sshllo.u32 0, 4
    %v4 = vld [vmem:[%s0] sm:%s3]
    %5 = vst [vmem:[#allocation0] sm:%s3] %v4
    %v6 = vld [vmem:[#allocation0] sm:$0xf]
    %vm7 = vcmask 7168
    %8 = vst.msk [vmem:[%s1] ss:$2 sm:$0xf] %vm7, %v6
    %v9 = vld [vmem:[#allocation0] sm:$0xf]
    %10 = vrot.lane.b32.xlu0 %v9, 127
    %v11 = vpop.permute.xlu0 %10
    %vm12 = vcmask 7168
    %s13 = scalar_lea.vmem %s1, 1
    %14 = vst.msk [vmem:[%s13] ss:$2 sm:$0xf] %vm12, %v11

// kernel: tile.8
$region0: #{tile.8}
  #allocation0 [shape = 's32[1]{0}', space=sflag, size = 0x4, scoped, tag = 'scoped memory for tile.8']
  %s0 = inlined_call_operand.vmem [shape: f32[2], index: 0, kind: input, shape index: {}]
  %s1 = inlined_call_operand.vmem [shape: f32[4,2], index: 1, kind: output, shape index: {}]
  // Predicated region
  $region2: #{tile.8} parent=0 // pred_check
    _
  $region3: #{tile.8} parent=0 // pred_check_branch
    %3 = sbr.rel (0) target = $region5
  $region4: #{tile.8} parent=0 // pred_region
    _
  $region5: #{tile.8} parent=0 // pred_fallthru
    _
  %v4 = vld [vmem:[%s0] ss:$0 sm:$0xff]
  %5 = vst [vmem:[%s1] sm:$0xf] %v4

// kernel: up_forward.5
$region0: #{up_forward.5}
  #allocation0 [shape = 'u32[]', space=smem, size = 0x4, offset = 0x4, fixed_abs, tag = 'smem constant byte address 0x4 - core index']
  #allocation1 [shape = 'u32[144,128]{1,0:T(1,128)}', space=vmem, size = 0x12000, scoped, tag = 'internal scratch']
  %s0 = inlined_call_operand.vmem [shape: f32[8,4], index: 0, kind: input, shape index: {}]
  %s1 = inlined_call_operand.vmem [shape: f32[2,4,128], index: 1, kind: input, shape index: {}]
  %s2 = inlined_call_operand.vmem [shape: f32[8,1], index: 2, kind: input, shape index: {}]
  %s3 = inlined_call_operand.vmem [shape: f32[2,8,128], index: 3, kind: output, shape index: {}]
  %s4 = sld [smem:[#allocation0]]
  $region45: #{up_forward.5} parent=0
    _
  %s6 = ssub.s32 1, %s4
  %s7 = scalar_select 0, %s6, %s4
  loop: start=0, step=1, limit=4
  $region2: #{up_forward.5} parent=0 // loop_pre_header
    _
  $region3: #{up_forward.5} parent=0 // loop_header
    %s9 = sphi 0, %s13
    %p10 = scmp.ge.s32.totalorder %s9, 4
    %s16 = sphi 0, %s28
    %s17 = sphi 0, %s24
    %s18 = sphi 0, %s16
    %s19 = sphi 0, %s17
    %s20 = sphi 0, %s18
    %s21 = sphi 0, %s19
    %s29 = sphi 0, %s29
    %s31 = sphi 0, %s29
    %s32 = sphi 0, %s31
    %s46 = sphi 0, %s32
    %s54 = sphi 0, %s56
    %s57 = sphi 0, %s54
    %s58 = sphi 0, %s57
    %s74 = sphi 0, %s58
    %s78 = sphi 0, %s78
    %s80 = sphi 0, %s78
    %s81 = sphi 0, %s80
    %s95 = sphi 0, %s81
    %s103 = sphi 0, %s105
    %s106 = sphi 0, %s103
    %s107 = sphi 0, %s106
    %s123 = sphi 0, %s107
  $region4: #{up_forward.5} parent=0 // loop_header_branch
    %12 = sbr.rel (%p10) target = $region8
  $region5: #{up_forward.5} parent=0 // loop_body
    %s14 = ssub.s32 %s9, 1
    %s15 = ssub.s32 %s9, 2
    %s22 = sadd.s32 1, %s17
    %p23 = scmp.ge.s32.totalorder %s22, 1
    %s24 = scalar_select %p23, 0, %s22
    %s25 = sadd.s32 1, %s16
    %s26 = scalar_select %p23, %s25, %s16
    %p27 = scmp.ge.s32.totalorder %s26, 2
    %s28 = scalar_select %p27, 0, %s26
    %s30 = sadd.s32 %s29, 1
    %p33 = scmp.eq.s32.totalorder %s9, 1
    %p34 = scmp.ne.s32.totalorder %s29, %s31
    %p35 = scmp.eq.s32.totalorder %s9, 0
    %p36 = por %p34, %p35
    %p37 = scmp.ne.s32.totalorder %s29, %s31
    %p38 = scmp.eq.s32.totalorder %s14, 1
    %p39 = por %p37, %p38
    %p40 = scmp.ne.s32.totalorder %s31, %s32
    %p41 = scmp.eq.s32.totalorder %s14, 0
    %p42 = por %p40, %p41
    %p43 = scmp.ne.s32.totalorder %s31, %s32
    %p44 = scmp.eq.s32.totalorder %s15, 1
    %p45 = por %p43, %p44
    %p47 = scmp.ne.s32.totalorder %s32, %s46
    %p48 = scmp.eq.s32.totalorder %s15, 0
    %p49 = por %p47, %p48
    %s50 = ssub.s32 %s16, %s28
    %s51 = ssub.s32 %s17, %s24
    %s52 = sor.u32 %s50, %s51
    %p53 = scmp.eq.s32.totalorder %s52, 0
    %s55 = sadd.s32 %s54, 1
    %s56 = scalar_select %p53, %s54, %s55
    %p59 = pneg %p53
    %p60 = scmp.eq.s32.totalorder %s9, 1
    %p61 = por %p59, %p60
    %p62 = scmp.ne.s32.totalorder %s54, %s57
    %p63 = scmp.eq.s32.totalorder %s9, 0
    %p64 = por %p62, %p63
    %p65 = scmp.ne.s32.totalorder %s54, %s57
    %p66 = scmp.eq.s32.totalorder %s14, 1
    %p67 = por %p65, %p66
    %p68 = scmp.ne.s32.totalorder %s57, %s58
    %p69 = scmp.eq.s32.totalorder %s14, 0
    %p70 = por %p68, %p69
    %p71 = scmp.ne.s32.totalorder %s57, %s58
    %p72 = scmp.eq.s32.totalorder %s15, 1
    %p73 = por %p71, %p72
    %p75 = scmp.ne.s32.totalorder %s58, %s74
    %p76 = scmp.eq.s32.totalorder %s15, 0
    %p77 = por %p75, %p76
    %s79 = sadd.s32 %s78, 1
    %p82 = scmp.eq.s32.totalorder %s9, 1
    %p83 = scmp.ne.s32.totalorder %s78, %s80
    %p84 = scmp.eq.s32.totalorder %s9, 0
    %p85 = por %p83, %p84
    %p86 = scmp.ne.s32.totalorder %s78, %s80
    %p87 = scmp.eq.s32.totalorder %s14, 1
    %p88 = por %p86, %p87
    %p89 = scmp.ne.s32.totalorder %s80, %s81
    %p90 = scmp.eq.s32.totalorder %s14, 0
    %p91 = por %p89, %p90
    %p92 = scmp.ne.s32.totalorder %s80, %s81
    %p93 = scmp.eq.s32.totalorder %s15, 1
    %p94 = por %p92, %p93
    %p96 = scmp.ne.s32.totalorder %s81, %s95
    %p97 = scmp.eq.s32.totalorder %s15, 0
    %p98 = por %p96, %p97
    %s99 = ssub.s32 %s16, %s28
    %s100 = ssub.s32 %s17, %s24
    %s101 = sor.u32 %s99, %s100
    %p102 = scmp.eq.s32.totalorder %s101, 0
    %s104 = sadd.s32 %s103, 1
    %s105 = scalar_select %p102, %s103, %s104
    %p108 = pneg %p102
    %p109 = scmp.eq.s32.totalorder %s9, 1
    %p110 = por %p108, %p109
    %p111 = scmp.ne.s32.totalorder %s103, %s106
    %p112 = scmp.eq.s32.totalorder %s9, 0
    %p113 = por %p111, %p112
    %p114 = scmp.ne.s32.totalorder %s103, %s106
    %p115 = scmp.eq.s32.totalorder %s14, 1
    %p116 = por %p114, %p115
    %p117 = scmp.ne.s32.totalorder %s106, %s107
    %p118 = scmp.eq.s32.totalorder %s14, 0
    %p119 = por %p117, %p118
    %p120 = scmp.ne.s32.totalorder %s106, %s107
    %p121 = scmp.eq.s32.totalorder %s15, 1
    %p122 = por %p120, %p121
    %p124 = scmp.ne.s32.totalorder %s107, %s123
    %p125 = scmp.eq.s32.totalorder %s15, 0
    %p126 = por %p124, %p125
    %p127 = scmp.le.s32.totalorder 1, %s9
    %p128 = scmp.lt.s32.totalorder %s9, 3
    %p129 = pnand %p127, %p128
    %p130 = pneg %p129
    // Predicated region
    $region9: #{up_forward.5} parent=5 // pred_check
      _
    $region10: #{up_forward.5} parent=5 // pred_check_branch
      %132 = sbr.rel (%p129) target = $region12
    $region11: #{up_forward.5} parent=5 // pred_region
      %s133 = ssub.s32 %s9, 1
      // Predicated region
      $region13: #{up_forward.5} parent=11 // pred_check
        %p134 = pneg %p42
      $region14: #{up_forward.5} parent=11 // pred_check_branch
        %136 = sbr.rel (%p134) target = $region16
      $region15: #{up_forward.5} parent=11 // pred_region
        _
      $region16: #{up_forward.5} parent=11 // pred_fallthru
        _
      // Predicated region
      $region17: #{up_forward.5} parent=11 // pred_check
        %p137 = pneg %p91
      $region18: #{up_forward.5} parent=11 // pred_check_branch
        %139 = sbr.rel (%p137) target = $region20
      $region19: #{up_forward.5} parent=11 // pred_region
        _
      $region20: #{up_forward.5} parent=11 // pred_fallthru
        _
    $region12: #{up_forward.5} parent=5 // pred_fallthru
      _
    %p140 = scmp.lt.s32.totalorder %s9, 2
    // Predicated region
    $region21: #{up_forward.5} parent=5 // pred_check
      %p141 = pneg %p140
    $region22: #{up_forward.5} parent=5 // pred_check_branch
      %143 = sbr.rel (%p141) target = $region24
    $region23: #{up_forward.5} parent=5 // pred_region
      // Predicated region
      $region25: #{up_forward.5} parent=23 // pred_check
        %p144 = pneg %p64
      $region26: #{up_forward.5} parent=23 // pred_check_branch
        %146 = sbr.rel (%p144) target = $region28
      $region27: #{up_forward.5} parent=23 // pred_region
        %p147 = scmp.lt.s32.totalorder %s16, 1
        %s148 = scalar_select %p147, %s16, 1
        %p149 = scmp.lt.s32.totalorder %s17, 0
        %s150 = scalar_select %p149, %s17, 0
        %s151 = sadd.s32 %s150, %s148
        %s152 = smul.addr %s151, 4
        %s153 = scalar_lea.vmem %s1, %s152
      $region28: #{up_forward.5} parent=23 // pred_fallthru
        _
    $region24: #{up_forward.5} parent=5 // pred_fallthru
      _
    %p154 = scmp.le.s32.totalorder 1, %s9
    %p155 = scmp.lt.s32.totalorder %s9, 3
    %p156 = pnand %p154, %p155
    %p157 = pneg %p156
    // Predicated region
    $region29: #{up_forward.5} parent=5 // pred_check
      _
    $region30: #{up_forward.5} parent=5 // pred_check_branch
      %159 = sbr.rel (%p156) target = $region32
    $region31: #{up_forward.5} parent=5 // pred_region
      %s160 = ssub.s32 %s9, 1
      %p161 = pneg %p42
      %p162 = pneg %p39
      %p163 = scmp.lt.s32.totalorder %s18, 1
      %s164 = scalar_select %p163, %s18, 1
      %p165 = scmp.lt.s32.totalorder %s19, 0
      %s166 = scalar_select %p165, %s19, 0
      %s167 = sadd.s32 %s166, %s164
      %s168 = smul.addr %s167, 4
      %s169 = scalar_lea.vmem %s1, %s168
      %p170 = pneg %p70
      %p171 = pneg %p67
      %p172 = pneg %p91
      %p173 = pneg %p88
      %p174 = pneg %p119
      %p175 = pneg %p116
      %p176 = scmp.lt.s32.totalorder %s18, 1
      %s177 = scalar_select %p176, %s18, 1
      %p178 = scmp.lt.s32.totalorder %s19, 0
      %s179 = scalar_select %p178, %s19, 0
      %s180 = sadd.s32 %s179, %s177
      %s181 = smul.addr %s180, 8
      %s182 = scalar_lea.vmem %s3, %s181
      %p183 = scmp.lt.s32.totalorder %s18, 1
      %s184 = scalar_select %p183, %s18, 1
      %p185 = scmp.lt.s32.totalorder %s19, 0
      %s186 = scalar_select %p185, %s19, 0
      %s187 = sadd.s32 %s186, %s184
      %s188 = smul.addr %s187, 4
      %s189 = scalar_lea.vmem %s1, %s188
      %p190 = scmp.lt.s32.totalorder %s18, 1
      %s191 = scalar_select %p190, %s18, 1
      %p192 = scmp.lt.s32.totalorder %s19, 0
      %s193 = scalar_select %p192, %s19, 0
      %s194 = sadd.s32 %s193, %s191
      %s195 = smul.addr %s194, 8
      %s196 = scalar_lea.vmem %s3, %s195
      %v197 = vld [vmem:[%s0] sm:$0xff]
      %v198 = vld [vmem:[%s189] sm:$0xf]
      %v199 = vld [vmem:[%s2] sm:$0xff]
      %201 = vset.pattern.permute.xlu0 0
      %202 = vperm.xlu0 %201, %v199
      %v203 = vpop.permute.xlu0 %202
      %vm205 = vcmask 31744
      %v207 = vsel %vm205, %v197, 0
      %vm209 = vcmask 1043456
      %v211 = vsel %vm209, %v198, 0
      %213 = vmatprep.subr.mxu0 0.0
      %214 = vmatpush1.msra.mxu0 %v211
      %215 = vmatprep.subr.mxu0 0.0
      %216 = vmatpush1.msra.mxu0 0.0
      %217 = vmatprep.subr.mxu0 0.0
      %218 = vmatpush1.msra.mxu0 0.0
      %219 = vmatprep.subr.mxu0 0.0
      %220 = vmatpush1.msra.mxu0 0.0
      %221 = vmatprep.subr.mxu0 0.0
      %222 = vmatpush1.msra.mxu0 0.0
      %223 = vmatprep.subr.mxu0 0.0
      %224 = vmatpush1.msra.mxu0 0.0
      %225 = vmatprep.subr.mxu0 0.0
      %226 = vmatpush1.msra.mxu0 0.0
      %227 = vmatprep.subr.mxu0 0.0
      %228 = vmatpush1.msra.mxu0 0.0
      %229 = vmatprep.subr.mxu0 0.0
      %230 = vmatpush1.msra.mxu0 0.0
      %231 = vmatprep.subr.mxu0 0.0
      %232 = vmatpush1.msra.mxu0 0.0
      %233 = vmatprep.subr.mxu0 0.0
      %234 = vmatpush1.msra.mxu0 0.0
      %235 = vmatprep.subr.mxu0 0.0
      %236 = vmatpush1.msra.mxu0 0.0
      %237 = vmatprep.subr.mxu0 0.0
      %238 = vmatpush1.msra.mxu0 0.0
      %239 = vmatprep.subr.mxu0 0.0
      %240 = vmatpush1.msra.mxu0 0.0
      %241 = vmatprep.subr.mxu0 0.0
      %242 = vmatpush1.msra.mxu0 0.0
      %243 = vmatprep.subr.mxu0 0.0
      %244 = vmatpush1.msra.mxu0 0.0
      %245 = vmatprep.subr.mxu0 0.0
      %246 = vmatpush1.msra.mxu0 0.0
      %247 = vmatprep.subr.mxu0 0.0
      %248 = vmatpush1.msra.mxu0 0.0
      %249 = vmatprep.subr.mxu0 0.0
      %250 = vmatpush1.msra.mxu0 0.0
      %251 = vmatprep.subr.mxu0 0.0
      %252 = vmatpush1.msra.mxu0 0.0
      %253 = vmatprep.subr.mxu0 0.0
      %254 = vmatpush1.msra.mxu0 0.0
      %255 = vmatprep.subr.mxu0 0.0
      %256 = vmatpush1.msra.mxu0 0.0
      %257 = vmatprep.subr.mxu0 0.0
      %258 = vmatpush1.msra.mxu0 0.0
      %259 = vmatprep.subr.mxu0 0.0
      %260 = vmatpush1.msra.mxu0 0.0
      %261 = vmatprep.subr.mxu0 0.0
      %262 = vmatpush1.msra.mxu0 0.0
      %263 = vmatprep.subr.mxu0 0.0
      %264 = vmatpush1.msra.mxu0 0.0
      %265 = vmatprep.subr.mxu0 0.0
      %266 = vmatpush1.msra.mxu0 0.0
      %267 = vmatprep.subr.mxu0 0.0
      %268 = vmatpush1.msra.mxu0 0.0
      %269 = vmatprep.subr.mxu0 0.0
      %270 = vmatpush1.msra.mxu0 0.0
      %271 = vmatprep.subr.mxu0 0.0
      %272 = vmatpush1.msra.mxu0 0.0
      %273 = vmatprep.subr.mxu0 0.0
      %274 = vmatpush1.msra.mxu0 0.0
      %275 = vmatprep.subr.mxu0 0.0
      %276 = vmatpush1.msra.mxu0 0.0
      %277 = vmatprep.mubr.f32.mxu0 0.0
      %278 = vmatmul.mubr.f32.gmra.mrb[0].mxu0 %v207
      %v279 = vpop.f32.mrb[0].mxu0
      %v280 = vadd.f32 %v203, %v279
      %v281 = vpop.f32.mrb[0].mxu0
      %282 = vdwg.mxu0
      %283 = vst [vmem:[%s196] sm:$0xff] %v280
      %p284 = scmp.lt.s32.totalorder %s18, 1
      %s285 = scalar_select %p284, %s18, 1
      %p286 = scmp.lt.s32.totalorder %s19, 0
      %s287 = scalar_select %p286, %s19, 0
      %s288 = sadd.s32 %s287, %s285
      %s289 = smul.addr %s288, 8
      %s290 = scalar_lea.vmem %s3, %s289
      // Predicated region
      $region33: #{up_forward.5} parent=31 // pred_check
        %p291 = pneg %p116
      $region34: #{up_forward.5} parent=31 // pred_check_branch
        %293 = sbr.rel (%p291) target = $region36
      $region35: #{up_forward.5} parent=31 // pred_region
        _
      $region36: #{up_forward.5} parent=31 // pred_fallthru
        _
    $region32: #{up_forward.5} parent=5 // pred_fallthru
      _
    %p294 = scmp.le.s32.totalorder 2, %s9
    // Predicated region
    $region37: #{up_forward.5} parent=5 // pred_check
      %p295 = pneg %p294
    $region38: #{up_forward.5} parent=5 // pred_check_branch
      %297 = sbr.rel (%p295) target = $region40
    $region39: #{up_forward.5} parent=5 // pred_region
      %s298 = ssub.s32 %s9, 2
      // Predicated region
      $region41: #{up_forward.5} parent=39 // pred_check
        %p299 = pneg %p122
      $region42: #{up_forward.5} parent=39 // pred_check_branch
        %301 = sbr.rel (%p299) target = $region44
      $region43: #{up_forward.5} parent=39 // pred_region
        %p302 = scmp.lt.s32.totalorder %s20, 1
        %s303 = scalar_select %p302, %s20, 1
        %p304 = scmp.lt.s32.totalorder %s21, 0
        %s305 = scalar_select %p304, %s21, 0
        %s306 = sadd.s32 %s305, %s303
        %s307 = smul.addr %s306, 8
        %s308 = scalar_lea.vmem %s3, %s307
      $region44: #{up_forward.5} parent=39 // pred_fallthru
        _
    $region40: #{up_forward.5} parent=5 // pred_fallthru
      _
  $region6: #{up_forward.5} parent=0 // loop_footer
    %s13 = sadd.s32 1, %s9
  $region7: #{up_forward.5} parent=0 // loop_footer_branch
    %8 = sbr.rel target = $region3
  $region8: #{up_forward.5} parent=0 // loop_exit
    _

// kernel: up_forward.6
$region0: #{up_forward.6}
  #allocation0 [shape = 'u32[]', space=smem, size = 0x4, offset = 0x4, fixed_abs, tag = 'smem constant byte address 0x4 - core index']
  #allocation1 [shape = 'u32[144,128]{1,0:T(1,128)}', space=vmem, size = 0x12000, scoped, tag = 'internal scratch']
  %s0 = inlined_call_operand.vmem [shape: f32[4,36], index: 0, kind: input, shape index: {}]
  %s1 = inlined_call_operand.vmem [shape: f32[2,36,256], index: 1, kind: input, shape index: {}]
  %s2 = inlined_call_operand.vmem [shape: f32[4,1], index: 2, kind: input, shape index: {}]
  %s3 = inlined_call_operand.vmem [shape: f32[2,4,256], index: 3, kind: output, shape index: {}]
  %s4 = sld [smem:[#allocation0]]
  $region45: #{up_forward.6} parent=0
    _
  %s6 = ssub.s32 1, %s4
  %s7 = scalar_select 0, %s6, %s4
  loop: start=0, step=1, limit=4
  $region2: #{up_forward.6} parent=0 // loop_pre_header
    _
  $region3: #{up_forward.6} parent=0 // loop_header
    %s9 = sphi 0, %s13
    %p10 = scmp.ge.s32.totalorder %s9, 4
    %s16 = sphi 0, %s28
    %s17 = sphi 0, %s24
    %s18 = sphi 0, %s16
    %s19 = sphi 0, %s17
    %s20 = sphi 0, %s18
    %s21 = sphi 0, %s19
    %s29 = sphi 0, %s29
    %s31 = sphi 0, %s29
    %s32 = sphi 0, %s31
    %s46 = sphi 0, %s32
    %s54 = sphi 0, %s56
    %s57 = sphi 0, %s54
    %s58 = sphi 0, %s57
    %s74 = sphi 0, %s58
    %s78 = sphi 0, %s78
    %s80 = sphi 0, %s78
    %s81 = sphi 0, %s80
    %s95 = sphi 0, %s81
    %s103 = sphi 0, %s105
    %s106 = sphi 0, %s103
    %s107 = sphi 0, %s106
    %s123 = sphi 0, %s107
  $region4: #{up_forward.6} parent=0 // loop_header_branch
    %12 = sbr.rel (%p10) target = $region8
  $region5: #{up_forward.6} parent=0 // loop_body
    %s14 = ssub.s32 %s9, 1
    %s15 = ssub.s32 %s9, 2
    %s22 = sadd.s32 1, %s17
    %p23 = scmp.ge.s32.totalorder %s22, 1
    %s24 = scalar_select %p23, 0, %s22
    %s25 = sadd.s32 1, %s16
    %s26 = scalar_select %p23, %s25, %s16
    %p27 = scmp.ge.s32.totalorder %s26, 2
    %s28 = scalar_select %p27, 0, %s26
    %s30 = sadd.s32 %s29, 1
    %p33 = scmp.eq.s32.totalorder %s9, 1
    %p34 = scmp.ne.s32.totalorder %s29, %s31
    %p35 = scmp.eq.s32.totalorder %s9, 0
    %p36 = por %p34, %p35
    %p37 = scmp.ne.s32.totalorder %s29, %s31
    %p38 = scmp.eq.s32.totalorder %s14, 1
    %p39 = por %p37, %p38
    %p40 = scmp.ne.s32.totalorder %s31, %s32
    %p41 = scmp.eq.s32.totalorder %s14, 0
    %p42 = por %p40, %p41
    %p43 = scmp.ne.s32.totalorder %s31, %s32
    %p44 = scmp.eq.s32.totalorder %s15, 1
    %p45 = por %p43, %p44
    %p47 = scmp.ne.s32.totalorder %s32, %s46
    %p48 = scmp.eq.s32.totalorder %s15, 0
    %p49 = por %p47, %p48
    %s50 = ssub.s32 %s16, %s28
    %s51 = ssub.s32 %s17, %s24
    %s52 = sor.u32 %s50, %s51
    %p53 = scmp.eq.s32.totalorder %s52, 0
    %s55 = sadd.s32 %s54, 1
    %s56 = scalar_select %p53, %s54, %s55
    %p59 = pneg %p53
    %p60 = scmp.eq.s32.totalorder %s9, 1
    %p61 = por %p59, %p60
    %p62 = scmp.ne.s32.totalorder %s54, %s57
    %p63 = scmp.eq.s32.totalorder %s9, 0
    %p64 = por %p62, %p63
    %p65 = scmp.ne.s32.totalorder %s54, %s57
    %p66 = scmp.eq.s32.totalorder %s14, 1
    %p67 = por %p65, %p66
    %p68 = scmp.ne.s32.totalorder %s57, %s58
    %p69 = scmp.eq.s32.totalorder %s14, 0
    %p70 = por %p68, %p69
    %p71 = scmp.ne.s32.totalorder %s57, %s58
    %p72 = scmp.eq.s32.totalorder %s15, 1
    %p73 = por %p71, %p72
    %p75 = scmp.ne.s32.totalorder %s58, %s74
    %p76 = scmp.eq.s32.totalorder %s15, 0
    %p77 = por %p75, %p76
    %s79 = sadd.s32 %s78, 1
    %p82 = scmp.eq.s32.totalorder %s9, 1
    %p83 = scmp.ne.s32.totalorder %s78, %s80
    %p84 = scmp.eq.s32.totalorder %s9, 0
    %p85 = por %p83, %p84
    %p86 = scmp.ne.s32.totalorder %s78, %s80
    %p87 = scmp.eq.s32.totalorder %s14, 1
    %p88 = por %p86, %p87
    %p89 = scmp.ne.s32.totalorder %s80, %s81
    %p90 = scmp.eq.s32.totalorder %s14, 0
    %p91 = por %p89, %p90
    %p92 = scmp.ne.s32.totalorder %s80, %s81
    %p93 = scmp.eq.s32.totalorder %s15, 1
    %p94 = por %p92, %p93
    %p96 = scmp.ne.s32.totalorder %s81, %s95
    %p97 = scmp.eq.s32.totalorder %s15, 0
    %p98 = por %p96, %p97
    %s99 = ssub.s32 %s16, %s28
    %s100 = ssub.s32 %s17, %s24
    %s101 = sor.u32 %s99, %s100
    %p102 = scmp.eq.s32.totalorder %s101, 0
    %s104 = sadd.s32 %s103, 1
    %s105 = scalar_select %p102, %s103, %s104
    %p108 = pneg %p102
    %p109 = scmp.eq.s32.totalorder %s9, 1
    %p110 = por %p108, %p109
    %p111 = scmp.ne.s32.totalorder %s103, %s106
    %p112 = scmp.eq.s32.totalorder %s9, 0
    %p113 = por %p111, %p112
    %p114 = scmp.ne.s32.totalorder %s103, %s106
    %p115 = scmp.eq.s32.totalorder %s14, 1
    %p116 = por %p114, %p115
    %p117 = scmp.ne.s32.totalorder %s106, %s107
    %p118 = scmp.eq.s32.totalorder %s14, 0
    %p119 = por %p117, %p118
    %p120 = scmp.ne.s32.totalorder %s106, %s107
    %p121 = scmp.eq.s32.totalorder %s15, 1
    %p122 = por %p120, %p121
    %p124 = scmp.ne.s32.totalorder %s107, %s123
    %p125 = scmp.eq.s32.totalorder %s15, 0
    %p126 = por %p124, %p125
    %p127 = scmp.le.s32.totalorder 1, %s9
    %p128 = scmp.lt.s32.totalorder %s9, 3
    %p129 = pnand %p127, %p128
    %p130 = pneg %p129
    // Predicated region
    $region9: #{up_forward.6} parent=5 // pred_check
      _
    $region10: #{up_forward.6} parent=5 // pred_check_branch
      %132 = sbr.rel (%p129) target = $region12
    $region11: #{up_forward.6} parent=5 // pred_region
      %s133 = ssub.s32 %s9, 1
      // Predicated region
      $region13: #{up_forward.6} parent=11 // pred_check
        %p134 = pneg %p42
      $region14: #{up_forward.6} parent=11 // pred_check_branch
        %136 = sbr.rel (%p134) target = $region16
      $region15: #{up_forward.6} parent=11 // pred_region
        _
      $region16: #{up_forward.6} parent=11 // pred_fallthru
        _
      // Predicated region
      $region17: #{up_forward.6} parent=11 // pred_check
        %p137 = pneg %p91
      $region18: #{up_forward.6} parent=11 // pred_check_branch
        %139 = sbr.rel (%p137) target = $region20
      $region19: #{up_forward.6} parent=11 // pred_region
        _
      $region20: #{up_forward.6} parent=11 // pred_fallthru
        _
    $region12: #{up_forward.6} parent=5 // pred_fallthru
      _
    %p140 = scmp.lt.s32.totalorder %s9, 2
    // Predicated region
    $region21: #{up_forward.6} parent=5 // pred_check
      %p141 = pneg %p140
    $region22: #{up_forward.6} parent=5 // pred_check_branch
      %143 = sbr.rel (%p141) target = $region24
    $region23: #{up_forward.6} parent=5 // pred_region
      // Predicated region
      $region25: #{up_forward.6} parent=23 // pred_check
        %p144 = pneg %p64
      $region26: #{up_forward.6} parent=23 // pred_check_branch
        %146 = sbr.rel (%p144) target = $region28
      $region27: #{up_forward.6} parent=23 // pred_region
        %s147 = smul.u32 2, %s17
        %p148 = scmp.lt.s32.totalorder %s16, 1
        %s149 = scalar_select %p148, %s16, 1
        %p150 = scmp.lt.s32.totalorder %s147, 1
        %s151 = scalar_select %p150, %s147, 1
        %s152 = smul.addr %s149, 10
        %s153 = sadd.s32 %s151, %s152
        %s154 = smul.addr %s153, 8
        %s155 = scalar_lea.vmem %s1, %s154
        %s156 = smul.u32 2, %s17
      $region28: #{up_forward.6} parent=23 // pred_fallthru
        _
    $region24: #{up_forward.6} parent=5 // pred_fallthru
      _
    %p157 = scmp.le.s32.totalorder 1, %s9
    %p158 = scmp.lt.s32.totalorder %s9, 3
    %p159 = pnand %p157, %p158
    %p160 = pneg %p159
    // Predicated region
    $region29: #{up_forward.6} parent=5 // pred_check
      _
    $region30: #{up_forward.6} parent=5 // pred_check_branch
      %162 = sbr.rel (%p159) target = $region32
    $region31: #{up_forward.6} parent=5 // pred_region
      %s163 = ssub.s32 %s9, 1
      %p164 = pneg %p42
      %p165 = pneg %p39
      %s166 = smul.u32 2, %s19
      %p167 = scmp.lt.s32.totalorder %s18, 1
      %s168 = scalar_select %p167, %s18, 1
      %p169 = scmp.lt.s32.totalorder %s166, 1
      %s170 = scalar_select %p169, %s166, 1
      %s171 = smul.addr %s168, 10
      %s172 = sadd.s32 %s170, %s171
      %s173 = smul.addr %s172, 8
      %s174 = scalar_lea.vmem %s1, %s173
      %p175 = pneg %p70
      %p176 = pneg %p67
      %p177 = pneg %p91
      %p178 = pneg %p88
      %p179 = pneg %p119
      %p180 = pneg %p116
      %s181 = smul.u32 2, %s19
      %p182 = scmp.lt.s32.totalorder %s18, 1
      %s183 = scalar_select %p182, %s18, 1
      %p184 = scmp.lt.s32.totalorder %s181, 1
      %s185 = scalar_select %p184, %s181, 1
      %s186 = smul.addr %s183, 2
      %s187 = sadd.s32 %s185, %s186
      %s188 = smul.addr %s187, 4
      %s189 = scalar_lea.vmem %s3, %s188
      %s190 = smul.u32 2, %s19
      %p191 = scmp.lt.s32.totalorder %s18, 1
      %s192 = scalar_select %p191, %s18, 1
      %p193 = scmp.lt.s32.totalorder %s190, 1
      %s194 = scalar_select %p193, %s190, 1
      %s195 = smul.addr %s192, 10
      %s196 = sadd.s32 %s194, %s195
      %s197 = smul.addr %s196, 8
      %s198 = scalar_lea.vmem %s1, %s197
      %s199 = smul.u32 2, %s19
      %s200 = smul.u32 2, %s19
      %p201 = scmp.lt.s32.totalorder %s18, 1
      %s202 = scalar_select %p201, %s18, 1
      %p203 = scmp.lt.s32.totalorder %s200, 1
      %s204 = scalar_select %p203, %s200, 1
      %s205 = smul.addr %s202, 2
      %s206 = sadd.s32 %s204, %s205
      %s207 = smul.addr %s206, 4
      %s208 = scalar_lea.vmem %s3, %s207
      %s209 = smul.u32 2, %s19
      %v210 = vld [vmem:[%s0] sm:$0xf]
      %v211 = vld [vmem:[%s198] sm:$0xff]
      %v212 = vld [vmem:[%s198 + $0x8] sm:$0xff]
      %v213 = vld [vmem:[%s198 + $0x10] sm:$0xff]
      %v214 = vld [vmem:[%s198 + $0x18] sm:$0xff]
      %v215 = vld [vmem:[%s198 + $0x20] sm:$0xff]
      %v216 = vld [vmem:[%s198 + $0x28] sm:$0xff]
      %v217 = vld [vmem:[%s198 + $0x30] sm:$0xff]
      %v218 = vld [vmem:[%s198 + $0x38] sm:$0xff]
      %v219 = vld [vmem:[%s198 + $0x40] sm:$0xf]
      %v220 = vld [vmem:[%s198 + $0x48] sm:$0xf]
      %v221 = vld [vmem:[%s2] sm:$0xf]
      %223 = vset.pattern.permute.xlu0 0
      %224 = vperm.xlu0 %223, %v221
      %v225 = vpop.permute.xlu0 %224
      %vm227 = vcmask 293888
      %v229 = vsel %vm227, %v210, 0
      %vm231 = vcmask 1043456
      %v233 = vsel %vm231, %v219, 0
      %v236 = vsel %vm231, %v220, 0
      %238 = vmatprep.subr.mxu0 %v212
      %239 = vmatpush1.msra.mxu0 %v211
      %240 = vmatprep.subr.mxu0 %v214
      %241 = vmatpush1.msra.mxu0 %v213
      %242 = vmatprep.subr.mxu0 %v216
      %243 = vmatpush1.msra.mxu0 %v215
      %244 = vmatprep.subr.mxu0 %v218
      %245 = vmatpush1.msra.mxu0 %v217
      %246 = vmatprep.subr.mxu0 %v236
      %247 = vmatpush1.msra.mxu0 %v233
      %248 = vmatprep.subr.mxu0 0.0
      %249 = vmatpush1.msra.mxu0 0.0
      %250 = vmatprep.subr.mxu0 0.0
      %251 = vmatpush1.msra.mxu0 0.0
      %252 = vmatprep.subr.mxu0 0.0
      %253 = vmatpush1.msra.mxu0 0.0
      %254 = vmatprep.subr.mxu0 0.0
      %255 = vmatpush1.msra.mxu0 0.0
      %256 = vmatprep.subr.mxu0 0.0
      %257 = vmatpush1.msra.mxu0 0.0
      %258 = vmatprep.subr.mxu0 0.0
      %259 = vmatpush1.msra.mxu0 0.0
      %260 = vmatprep.subr.mxu0 0.0
      %261 = vmatpush1.msra.mxu0 0.0
      %262 = vmatprep.subr.mxu0 0.0
      %263 = vmatpush1.msra.mxu0 0.0
      %264 = vmatprep.subr.mxu0 0.0
      %265 = vmatpush1.msra.mxu0 0.0
      %266 = vmatprep.subr.mxu0 0.0
      %267 = vmatpush1.msra.mxu0 0.0
      %268 = vmatprep.subr.mxu0 0.0
      %269 = vmatpush1.msra.mxu0 0.0
      %270 = vmatprep.subr.mxu0 0.0
      %271 = vmatpush1.msra.mxu0 0.0
      %272 = vmatprep.subr.mxu0 0.0
      %273 = vmatpush1.msra.mxu0 0.0
      %274 = vmatprep.subr.mxu0 0.0
      %275 = vmatpush1.msra.mxu0 0.0
      %276 = vmatprep.subr.mxu0 0.0
      %277 = vmatpush1.msra.mxu0 0.0
      %278 = vmatprep.subr.mxu0 0.0
      %279 = vmatpush1.msra.mxu0 0.0
      %280 = vmatprep.subr.mxu0 0.0
      %281 = vmatpush1.msra.mxu0 0.0
      %282 = vmatprep.subr.mxu0 0.0
      %283 = vmatpush1.msra.mxu0 0.0
      %284 = vmatprep.subr.mxu0 0.0
      %285 = vmatpush1.msra.mxu0 0.0
      %286 = vmatprep.subr.mxu0 0.0
      %287 = vmatpush1.msra.mxu0 0.0
      %288 = vmatprep.subr.mxu0 0.0
      %289 = vmatpush1.msra.mxu0 0.0
      %290 = vmatprep.subr.mxu0 0.0
      %291 = vmatpush1.msra.mxu0 0.0
      %292 = vmatprep.subr.mxu0 0.0
      %293 = vmatpush1.msra.mxu0 0.0
      %294 = vmatprep.subr.mxu0 0.0
      %295 = vmatpush1.msra.mxu0 0.0
      %296 = vmatprep.subr.mxu0 0.0
      %297 = vmatpush1.msra.mxu0 0.0
      %298 = vmatprep.subr.mxu0 0.0
      %299 = vmatpush1.msra.mxu0 0.0
      %300 = vmatprep.subr.mxu0 0.0
      %301 = vmatpush1.msra.mxu0 0.0
      %302 = vmatprep.mubr.f32.mxu0 0.0
      %303 = vmatmul.mubr.f32.gmra.mrb[0].mxu0 %v229
      %v304 = vpop.f32.mrb[0].mxu0
      %v305 = vadd.f32 %v225, %v304
      %v306 = vpop.f32.mrb[0].mxu0
      %v307 = vadd.f32 %v225, %v306
      %308 = vdwg.mxu0
      %v311 = vcombine.low %v305, %v307
      %313 = vst [vmem:[%s208] sm:$0xff] %v311
      %s314 = smul.u32 2, %s19
      %p315 = scmp.lt.s32.totalorder %s18, 1
      %s316 = scalar_select %p315, %s18, 1
      %p317 = scmp.lt.s32.totalorder %s314, 1
      %s318 = scalar_select %p317, %s314, 1
      %s319 = smul.addr %s316, 2
      %s320 = sadd.s32 %s318, %s319
      %s321 = smul.addr %s320, 4
      %s322 = scalar_lea.vmem %s3, %s321
      // Predicated region
      $region33: #{up_forward.6} parent=31 // pred_check
        %p323 = pneg %p116
      $region34: #{up_forward.6} parent=31 // pred_check_branch
        %325 = sbr.rel (%p323) target = $region36
      $region35: #{up_forward.6} parent=31 // pred_region
        %s326 = smul.u32 2, %s19
      $region36: #{up_forward.6} parent=31 // pred_fallthru
        _
    $region32: #{up_forward.6} parent=5 // pred_fallthru
      _
    %p327 = scmp.le.s32.totalorder 2, %s9
    // Predicated region
    $region37: #{up_forward.6} parent=5 // pred_check
      %p328 = pneg %p327
    $region38: #{up_forward.6} parent=5 // pred_check_branch
      %330 = sbr.rel (%p328) target = $region40
    $region39: #{up_forward.6} parent=5 // pred_region
      %s331 = ssub.s32 %s9, 2
      // Predicated region
      $region41: #{up_forward.6} parent=39 // pred_check
        %p332 = pneg %p122
      $region42: #{up_forward.6} parent=39 // pred_check_branch
        %334 = sbr.rel (%p332) target = $region44
      $region43: #{up_forward.6} parent=39 // pred_region
        %s335 = smul.u32 2, %s21
        %p336 = scmp.lt.s32.totalorder %s20, 1
        %s337 = scalar_select %p336, %s20, 1
        %p338 = scmp.lt.s32.totalorder %s335, 1
        %s339 = scalar_select %p338, %s335, 1
        %s340 = smul.addr %s337, 2
        %s341 = sadd.s32 %s339, %s340
        %s342 = smul.addr %s341, 4
        %s343 = scalar_lea.vmem %s3, %s342
      $region44: #{up_forward.6} parent=39 // pred_fallthru
        _
    $region40: #{up_forward.6} parent=5 // pred_fallthru
      _
  $region6: #{up_forward.6} parent=0 // loop_footer
    %s13 = sadd.s32 1, %s9
  $region7: #{up_forward.6} parent=0 // loop_footer_branch
    %8 = sbr.rel target = $region3
  $region8: #{up_forward.6} parent=0 // loop_exit
    _

// kernel: up_forward.7
$region0: #{up_forward.7}
  #allocation0 [shape = 'u32[]', space=smem, size = 0x4, offset = 0x4, fixed_abs, tag = 'smem constant byte address 0x4 - core index']
  #allocation1 [shape = 'u32[144,128]{1,0:T(1,128)}', space=vmem, size = 0x12000, scoped, tag = 'internal scratch']
  %s0 = inlined_call_operand.vmem [shape: f32[2,4,256], index: 0, kind: input, shape index: {}]
  %s1 = inlined_call_operand.vmem [shape: f32[4,1], index: 1, kind: input, shape index: {}]
  %s2 = inlined_call_operand.vmem [shape: f32[4,1], index: 2, kind: input, shape index: {}]
  %s3 = inlined_call_operand.vmem [shape: f32[2,4,256], index: 3, kind: output, shape index: {}]
  %s4 = sld [smem:[#allocation0]]
  $region45: #{up_forward.7} parent=0
    _
  %s6 = ssub.s32 1, %s4
  %s7 = scalar_select 0, %s6, %s4
  loop: start=0, step=1, limit=4
  $region2: #{up_forward.7} parent=0 // loop_pre_header
    _
  $region3: #{up_forward.7} parent=0 // loop_header
    %s9 = sphi 0, %s13
    %p10 = scmp.ge.s32.totalorder %s9, 4
    %s16 = sphi 0, %s28
    %s17 = sphi 0, %s24
    %s18 = sphi 0, %s16
    %s19 = sphi 0, %s17
    %s20 = sphi 0, %s18
    %s21 = sphi 0, %s19
    %s33 = sphi 0, %s35
    %s36 = sphi 0, %s33
    %s37 = sphi 0, %s36
    %s53 = sphi 0, %s37
    %s57 = sphi 0, %s57
    %s59 = sphi 0, %s57
    %s60 = sphi 0, %s59
    %s74 = sphi 0, %s60
    %s78 = sphi 0, %s78
    %s80 = sphi 0, %s78
    %s81 = sphi 0, %s80
    %s95 = sphi 0, %s81
    %s103 = sphi 0, %s105
    %s106 = sphi 0, %s103
    %s107 = sphi 0, %s106
    %s123 = sphi 0, %s107
  $region4: #{up_forward.7} parent=0 // loop_header_branch
    %12 = sbr.rel (%p10) target = $region8
  $region5: #{up_forward.7} parent=0 // loop_body
    %s14 = ssub.s32 %s9, 1
    %s15 = ssub.s32 %s9, 2
    %s22 = sadd.s32 1, %s17
    %p23 = scmp.ge.s32.totalorder %s22, 1
    %s24 = scalar_select %p23, 0, %s22
    %s25 = sadd.s32 1, %s16
    %s26 = scalar_select %p23, %s25, %s16
    %p27 = scmp.ge.s32.totalorder %s26, 2
    %s28 = scalar_select %p27, 0, %s26
    %s29 = ssub.s32 %s16, %s28
    %s30 = ssub.s32 %s17, %s24
    %s31 = sor.u32 %s29, %s30
    %p32 = scmp.eq.s32.totalorder %s31, 0
    %s34 = sadd.s32 %s33, 1
    %s35 = scalar_select %p32, %s33, %s34
    %p38 = pneg %p32
    %p39 = scmp.eq.s32.totalorder %s9, 1
    %p40 = por %p38, %p39
    %p41 = scmp.ne.s32.totalorder %s33, %s36
    %p42 = scmp.eq.s32.totalorder %s9, 0
    %p43 = por %p41, %p42
    %p44 = scmp.ne.s32.totalorder %s33, %s36
    %p45 = scmp.eq.s32.totalorder %s14, 1
    %p46 = por %p44, %p45
    %p47 = scmp.ne.s32.totalorder %s36, %s37
    %p48 = scmp.eq.s32.totalorder %s14, 0
    %p49 = por %p47, %p48
    %p50 = scmp.ne.s32.totalorder %s36, %s37
    %p51 = scmp.eq.s32.totalorder %s15, 1
    %p52 = por %p50, %p51
    %p54 = scmp.ne.s32.totalorder %s37, %s53
    %p55 = scmp.eq.s32.totalorder %s15, 0
    %p56 = por %p54, %p55
    %s58 = sadd.s32 %s57, 1
    %p61 = scmp.eq.s32.totalorder %s9, 1
    %p62 = scmp.ne.s32.totalorder %s57, %s59
    %p63 = scmp.eq.s32.totalorder %s9, 0
    %p64 = por %p62, %p63
    %p65 = scmp.ne.s32.totalorder %s57, %s59
    %p66 = scmp.eq.s32.totalorder %s14, 1
    %p67 = por %p65, %p66
    %p68 = scmp.ne.s32.totalorder %s59, %s60
    %p69 = scmp.eq.s32.totalorder %s14, 0
    %p70 = por %p68, %p69
    %p71 = scmp.ne.s32.totalorder %s59, %s60
    %p72 = scmp.eq.s32.totalorder %s15, 1
    %p73 = por %p71, %p72
    %p75 = scmp.ne.s32.totalorder %s60, %s74
    %p76 = scmp.eq.s32.totalorder %s15, 0
    %p77 = por %p75, %p76
    %s79 = sadd.s32 %s78, 1
    %p82 = scmp.eq.s32.totalorder %s9, 1
    %p83 = scmp.ne.s32.totalorder %s78, %s80
    %p84 = scmp.eq.s32.totalorder %s9, 0
    %p85 = por %p83, %p84
    %p86 = scmp.ne.s32.totalorder %s78, %s80
    %p87 = scmp.eq.s32.totalorder %s14, 1
    %p88 = por %p86, %p87
    %p89 = scmp.ne.s32.totalorder %s80, %s81
    %p90 = scmp.eq.s32.totalorder %s14, 0
    %p91 = por %p89, %p90
    %p92 = scmp.ne.s32.totalorder %s80, %s81
    %p93 = scmp.eq.s32.totalorder %s15, 1
    %p94 = por %p92, %p93
    %p96 = scmp.ne.s32.totalorder %s81, %s95
    %p97 = scmp.eq.s32.totalorder %s15, 0
    %p98 = por %p96, %p97
    %s99 = ssub.s32 %s16, %s28
    %s100 = ssub.s32 %s17, %s24
    %s101 = sor.u32 %s99, %s100
    %p102 = scmp.eq.s32.totalorder %s101, 0
    %s104 = sadd.s32 %s103, 1
    %s105 = scalar_select %p102, %s103, %s104
    %p108 = pneg %p102
    %p109 = scmp.eq.s32.totalorder %s9, 1
    %p110 = por %p108, %p109
    %p111 = scmp.ne.s32.totalorder %s103, %s106
    %p112 = scmp.eq.s32.totalorder %s9, 0
    %p113 = por %p111, %p112
    %p114 = scmp.ne.s32.totalorder %s103, %s106
    %p115 = scmp.eq.s32.totalorder %s14, 1
    %p116 = por %p114, %p115
    %p117 = scmp.ne.s32.totalorder %s106, %s107
    %p118 = scmp.eq.s32.totalorder %s14, 0
    %p119 = por %p117, %p118
    %p120 = scmp.ne.s32.totalorder %s106, %s107
    %p121 = scmp.eq.s32.totalorder %s15, 1
    %p122 = por %p120, %p121
    %p124 = scmp.ne.s32.totalorder %s107, %s123
    %p125 = scmp.eq.s32.totalorder %s15, 0
    %p126 = por %p124, %p125
    %p127 = scmp.le.s32.totalorder 1, %s9
    %p128 = scmp.lt.s32.totalorder %s9, 3
    %p129 = pnand %p127, %p128
    %p130 = pneg %p129
    // Predicated region
    $region9: #{up_forward.7} parent=5 // pred_check
      _
    $region10: #{up_forward.7} parent=5 // pred_check_branch
      %132 = sbr.rel (%p129) target = $region12
    $region11: #{up_forward.7} parent=5 // pred_region
      %s133 = ssub.s32 %s9, 1
      // Predicated region
      $region13: #{up_forward.7} parent=11 // pred_check
        %p134 = pneg %p70
      $region14: #{up_forward.7} parent=11 // pred_check_branch
        %136 = sbr.rel (%p134) target = $region16
      $region15: #{up_forward.7} parent=11 // pred_region
        _
      $region16: #{up_forward.7} parent=11 // pred_fallthru
        _
      // Predicated region
      $region17: #{up_forward.7} parent=11 // pred_check
        %p137 = pneg %p91
      $region18: #{up_forward.7} parent=11 // pred_check_branch
        %139 = sbr.rel (%p137) target = $region20
      $region19: #{up_forward.7} parent=11 // pred_region
        _
      $region20: #{up_forward.7} parent=11 // pred_fallthru
        _
    $region12: #{up_forward.7} parent=5 // pred_fallthru
      _
    %p140 = scmp.lt.s32.totalorder %s9, 2
    // Predicated region
    $region21: #{up_forward.7} parent=5 // pred_check
      %p141 = pneg %p140
    $region22: #{up_forward.7} parent=5 // pred_check_branch
      %143 = sbr.rel (%p141) target = $region24
    $region23: #{up_forward.7} parent=5 // pred_region
      // Predicated region
      $region25: #{up_forward.7} parent=23 // pred_check
        %p144 = pneg %p43
      $region26: #{up_forward.7} parent=23 // pred_check_branch
        %146 = sbr.rel (%p144) target = $region28
      $region27: #{up_forward.7} parent=23 // pred_region
        %s147 = smul.u32 2, %s17
        %p148 = scmp.lt.s32.totalorder %s16, 1
        %s149 = scalar_select %p148, %s16, 1
        %p150 = scmp.lt.s32.totalorder %s147, 1
        %s151 = scalar_select %p150, %s147, 1
        %s152 = smul.addr %s149, 2
        %s153 = sadd.s32 %s151, %s152
        %s154 = smul.addr %s153, 4
        %s155 = scalar_lea.vmem %s0, %s154
        %s156 = smul.u32 2, %s17
      $region28: #{up_forward.7} parent=23 // pred_fallthru
        _
    $region24: #{up_forward.7} parent=5 // pred_fallthru
      _
    %p157 = scmp.le.s32.totalorder 1, %s9
    %p158 = scmp.lt.s32.totalorder %s9, 3
    %p159 = pnand %p157, %p158
    %p160 = pneg %p159
    // Predicated region
    $region29: #{up_forward.7} parent=5 // pred_check
      _
    $region30: #{up_forward.7} parent=5 // pred_check_branch
      %162 = sbr.rel (%p159) target = $region32
    $region31: #{up_forward.7} parent=5 // pred_region
      %s163 = ssub.s32 %s9, 1
      %s164 = smul.u32 2, %s19
      %p165 = scmp.lt.s32.totalorder %s18, 1
      %s166 = scalar_select %p165, %s18, 1
      %p167 = scmp.lt.s32.totalorder %s164, 1
      %s168 = scalar_select %p167, %s164, 1
      %s169 = smul.addr %s166, 2
      %s170 = sadd.s32 %s168, %s169
      %s171 = smul.addr %s170, 4
      %s172 = scalar_lea.vmem %s0, %s171
      %p173 = pneg %p49
      %p174 = pneg %p46
      %p175 = pneg %p70
      %p176 = pneg %p67
      %p177 = pneg %p91
      %p178 = pneg %p88
      %p179 = pneg %p119
      %p180 = pneg %p116
      %s181 = smul.u32 2, %s19
      %p182 = scmp.lt.s32.totalorder %s18, 1
      %s183 = scalar_select %p182, %s18, 1
      %p184 = scmp.lt.s32.totalorder %s181, 1
      %s185 = scalar_select %p184, %s181, 1
      %s186 = smul.addr %s183, 2
      %s187 = sadd.s32 %s185, %s186
      %s188 = smul.addr %s187, 4
      %s189 = scalar_lea.vmem %s3, %s188
      %s190 = smul.u32 2, %s19
      %p191 = scmp.lt.s32.totalorder %s18, 1
      %s192 = scalar_select %p191, %s18, 1
      %p193 = scmp.lt.s32.totalorder %s190, 1
      %s194 = scalar_select %p193, %s190, 1
      %s195 = smul.addr %s192, 2
      %s196 = sadd.s32 %s194, %s195
      %s197 = smul.addr %s196, 4
      %s198 = scalar_lea.vmem %s0, %s197
      %s199 = smul.u32 2, %s19
      %s200 = smul.u32 2, %s19
      %p201 = scmp.lt.s32.totalorder %s18, 1
      %s202 = scalar_select %p201, %s18, 1
      %p203 = scmp.lt.s32.totalorder %s200, 1
      %s204 = scalar_select %p203, %s200, 1
      %s205 = smul.addr %s202, 2
      %s206 = sadd.s32 %s204, %s205
      %s207 = smul.addr %s206, 4
      %s208 = scalar_lea.vmem %s3, %s207
      %s209 = smul.u32 2, %s19
      %v210 = vld [vmem:[%s198] sm:$0xff]
      %v211 = vld [vmem:[%s1] sm:$0xf]
      %213 = vset.pattern.permute.xlu0 0
      %214 = vperm.xlu0 %213, %v211
      %v215 = vpop.permute.xlu0 %214
      %v217 = vunpack.c.l.s4 839922192
      %v218 = vunpack.c.0.s8 %v217
      %v219 = vlaneseq
      %v220 = vshrl.u32 %v219, 7
      %v221 = vsub.s32 %v218, %v220
      %v222 = vrot.slane %v215, %v221
      %v224 = vmul.f32 %v210, %v222
      %v225 = vld [vmem:[%s2] sm:$0xf]
      %227 = vset.pattern.permute.xlu0 0
      %228 = vperm.xlu0 %227, %v225
      %v229 = vpop.permute.xlu0 %228
      %v231 = vunpack.c.l.s4 839922192
      %v232 = vunpack.c.0.s8 %v231
      %v233 = vlaneseq
      %v234 = vshrl.u32 %v233, 7
      %v235 = vsub.s32 %v232, %v234
      %v236 = vrot.slane %v229, %v235
      %v238 = vadd.f32 %v224, %v236
      %v239 = vmax.f32 %v238, 0.0
      %240 = vst [vmem:[%s208] sm:$0xff] %v239
      %s241 = smul.u32 2, %s19
      %p242 = scmp.lt.s32.totalorder %s18, 1
      %s243 = scalar_select %p242, %s18, 1
      %p244 = scmp.lt.s32.totalorder %s241, 1
      %s245 = scalar_select %p244, %s241, 1
      %s246 = smul.addr %s243, 2
      %s247 = sadd.s32 %s245, %s246
      %s248 = smul.addr %s247, 4
      %s249 = scalar_lea.vmem %s3, %s248
      // Predicated region
      $region33: #{up_forward.7} parent=31 // pred_check
        %p250 = pneg %p116
      $region34: #{up_forward.7} parent=31 // pred_check_branch
        %252 = sbr.rel (%p250) target = $region36
      $region35: #{up_forward.7} parent=31 // pred_region
        %s253 = smul.u32 2, %s19
      $region36: #{up_forward.7} parent=31 // pred_fallthru
        _
    $region32: #{up_forward.7} parent=5 // pred_fallthru
      _
    %p254 = scmp.le.s32.totalorder 2, %s9
    // Predicated region
    $region37: #{up_forward.7} parent=5 // pred_check
      %p255 = pneg %p254
    $region38: #{up_forward.7} parent=5 // pred_check_branch
      %257 = sbr.rel (%p255) target = $region40
    $region39: #{up_forward.7} parent=5 // pred_region
      %s258 = ssub.s32 %s9, 2
      // Predicated region
      $region41: #{up_forward.7} parent=39 // pred_check
        %p259 = pneg %p122
      $region42: #{up_forward.7} parent=39 // pred_check_branch
        %261 = sbr.rel (%p259) target = $region44
      $region43: #{up_forward.7} parent=39 // pred_region
        %s262 = smul.u32 2, %s21
        %p263 = scmp.lt.s32.totalorder %s20, 1
        %s264 = scalar_select %p263, %s20, 1
        %p265 = scmp.lt.s32.totalorder %s262, 1
        %s266 = scalar_select %p265, %s262, 1
        %s267 = smul.addr %s264, 2
        %s268 = sadd.s32 %s266, %s267
        %s269 = smul.addr %s268, 4
        %s270 = scalar_lea.vmem %s3, %s269
      $region44: #{up_forward.7} parent=39 // pred_fallthru
        _
    $region40: #{up_forward.7} parent=5 // pred_fallthru
      _
  $region6: #{up_forward.7} parent=0 // loop_footer
    %s13 = sadd.s32 1, %s9
  $region7: #{up_forward.7} parent=0 // loop_footer_branch
    %8 = sbr.rel target = $region3
  $region8: #{up_forward.7} parent=0 // loop_exit
    _

</llo_original>
